<compile_context>
chip_gen: v7x
topology: tpu7x:2x2x1
jax: 0.10.0
libtpu: 0.0.40
codegen_flags: <defaults>
</compile_context>

<pallas_src>
import math

import jax
import jax.numpy as jnp
from jax.experimental import pallas as pl
from jax.experimental.pallas import tpu as pltpu


def _rmsnorm_kernel(x_ref, g_ref, o_ref):
    # x_ref: (TILE_ROWS, D), g_ref: (1, D), o_ref: (TILE_ROWS, D)
    x = x_ref[...].astype(jnp.float32)
    g = g_ref[...].astype(jnp.float32)
    # rms = ||x||_2 / sqrt(D) = sqrt(mean(x^2));  out = x / rms * gain
    ms = jnp.mean(x * x, axis=-1, keepdims=True)
    inv_rms = jax.lax.rsqrt(ms)  # no epsilon, exactly like the reference module
    o_ref[...] = (x * inv_rms * g).astype(o_ref.dtype)


def rmsnorm(x, gain, *, tile_rows=None, vmem_buffer_budget_bytes=24 * 1024 * 1024):
    """x: (..., D) array, gain: (D,).  Returns same shape/dtype as x."""
    orig_shape = x.shape
    D = orig_shape[-1]
    x2 = x.reshape(-1, D)
    n_rows = x2.shape[0]

    itemsize = jnp.dtype(x.dtype).itemsize
    # Packed sublane count per dtype width (f32 -> 8, bf16 -> 16, int8/fp8 -> 32).
    sublane = {4: 8, 2: 16, 1: 32}.get(itemsize, 8)

    if tile_rows is None:
        # Double-buffered input + output tiles: 4 * tile_rows * D * itemsize bytes.
        max_rows_by_vmem = max(sublane, vmem_buffer_budget_bytes // (4 * D * itemsize))
        tile_rows = min(1024, max_rows_by_vmem)
    # Don't exceed the (sublane-rounded) row count; keep sublane alignment.
    tile_rows = min(tile_rows, pl.cdiv(n_rows, sublane) * sublane)
    tile_rows = max(sublane, (tile_rows // sublane) * sublane)

    # Partial last block (if tile_rows does not divide n_rows) is handled by
    # Pallas: out-of-bounds stores are masked, so no host-side pad/slice.
    grid_rows = pl.cdiv(n_rows, tile_rows)

    gain2 = gain.reshape(1, D)

    tile_bytes = tile_rows * D * itemsize
    # 2x in-tile + 2x out-tile (double buffering) + gain + slack.
    vmem_limit = min(int(4 * tile_bytes + D * 4 + (4 << 20)), 128 * 1024 * 1024)

    # NOTE: for real model dims D is a multiple of 128 (lane-dense stores); the
    # small __main__ example uses D=32, which still lowers correctly since the
    # block's last dim equals the full array dim.

    out = pl.pallas_call(
        _rmsnorm_kernel,
        out_shape=jax.ShapeDtypeStruct((n_rows, D), x.dtype),
        grid_spec=pltpu.PrefetchScalarGridSpec(
            num_scalar_prefetch=0,
            grid=(grid_rows,),
            in_specs=[
                pl.BlockSpec((tile_rows, D), lambda i: (i, 0)),
                pl.BlockSpec((1, D), lambda i: (0, 0)),
            ],
            out_specs=pl.BlockSpec((tile_rows, D), lambda i: (i, 0)),
        ),
        compiler_params=pltpu.CompilerParams(
            dimension_semantics=("parallel",),
            vmem_limit_bytes=vmem_limit,
        ),
        cost_estimate=pl.CostEstimate(
            flops=3 * n_rows * D,
            transcendentals=n_rows,
            bytes_accessed=2 * n_rows * D * itemsize + D * itemsize,
        ),
    )(x2, gain2)

    return out.reshape(orig_shape)


if __name__ == "__main__":
    # Small shapes consistent with the module: batch=2, seq=8, n_embd=32.
    B, T, D = 2, 8, 32
    key = jax.random.PRNGKey(0)
    x = jax.random.normal(key, (B, T, D), dtype=jnp.float32)
    gain = jnp.ones((D,), dtype=jnp.float32)  # nn.Parameter(torch.ones(ndim))

    out = rmsnorm(x, gain)
    out = jax.block_until_ready(out)

    # Reference check in plain JAX (mirrors torch semantics).
    rms = jnp.linalg.norm(x, axis=-1, keepdims=True) / math.sqrt(D)
    ref = x / rms * gain
    assert out.shape == x.shape and out.dtype == x.dtype
    assert jnp.allclose(out, ref, atol=1e-5, rtol=1e-5)

    print("KERNEL_OK")
</pallas_src>

<mosaic_0001>
module attributes {stable_mosaic.version = 11 : i64} {
  func.func @_rmsnorm_kernel(%arg0: i32, %arg1: memref<16x32xf32, #tpu.memory_space<vmem>>, %arg2: memref<1x32xf32, #tpu.memory_space<vmem>>, %arg3: memref<16x32xf32, #tpu.memory_space<vmem>>) attributes {dimension_semantics = [#tpu.dimension_semantics<parallel>], iteration_bounds = array<i64: 1>, scalar_prefetch = 0 : i64, scratch_operands = 0 : i64, tpu.core_type = #tpu.core_type<tc>, window_params = [{transform_indices = @transform_0, window_bounds = array<i64: 16, 32>}, {pipeline_mode = #tpu.pipeline_mode<synchronous>, transform_indices = @transform_1, window_bounds = array<i64: 1, 32>}, {transform_indices = @transform_2, window_bounds = array<i64: 16, 32>}]} {
    %c0 = arith.constant 0 : index
    %c0_0 = arith.constant 0 : index
    %0 = vector.load %arg1[%c0, %c0_0] : memref<16x32xf32, #tpu.memory_space<vmem>>, vector<16x32xf32>
    %c0_1 = arith.constant 0 : index
    %c0_2 = arith.constant 0 : index
    %1 = vector.load %arg2[%c0_1, %c0_2] : memref<1x32xf32, #tpu.memory_space<vmem>>, vector<1x32xf32>
    %2 = arith.mulf %0, %0 : vector<16x32xf32>
    %cst = arith.constant dense<0.000000e+00> : vector<16xf32>
    %3 = vector.multi_reduction <add>, %2, %cst [1] : vector<16x32xf32> to vector<16xf32>
    %4 = vector.shape_cast %3 : vector<16xf32> to vector<16x1xf32>
    %cst_3 = arith.constant 3.200000e+01 : f32
    %5 = vector.broadcast %cst_3 : f32 to vector<16x1xf32>
    %6 = arith.divf %4, %5 : vector<16x1xf32>
    %7 = math.rsqrt %6 : vector<16x1xf32>
    %8 = vector.broadcast %7 : vector<16x1xf32> to vector<16x32xf32>
    %9 = arith.mulf %0, %8 : vector<16x32xf32>
    %10 = vector.broadcast %1 : vector<1x32xf32> to vector<16x32xf32>
    %11 = arith.mulf %9, %10 : vector<16x32xf32>
    %c0_4 = arith.constant 0 : index
    %c0_5 = arith.constant 0 : index
    %12 = vector.load %arg3[%c0_4, %c0_5] : memref<16x32xf32, #tpu.memory_space<vmem>>, vector<16x32xf32>
    tpu.vector_store %arg3[%c0_4, %c0_5], %11 {strides = array<i32>} : memref<16x32xf32, #tpu.memory_space<vmem>>, vector<16x32xf32>,
    return
  }
  func.func @transform_0(%arg0: i32) -> (i32, i32) {
    %c0_i32 = arith.constant 0 : i32
    %c0_i32_0 = arith.constant 0 : i32
    return %arg0, %c0_i32 : i32, i32
  }
  func.func @transform_1(%arg0: i32) -> (i32, i32) {
    %c0_i32 = arith.constant 0 : i32
    %c0_i32_0 = arith.constant 0 : i32
    %c0_i32_1 = arith.constant 0 : i32
    return %c0_i32, %c0_i32_0 : i32, i32
  }
  func.func @transform_2(%arg0: i32) -> (i32, i32) {
    %c0_i32 = arith.constant 0 : i32
    %c0_i32_0 = arith.constant 0 : i32
    return %arg0, %c0_i32 : i32, i32
  }
}

</mosaic_0001>

<llo_original>
// kernel: tpu_custom_call.1
$region0: #{tpu_custom_call.1}
  #allocation0 [shape = 'u32[]', space=smem, size = 0x4, offset = 0x4, fixed_abs, tag = 'smem constant byte address 0x4 - core index']
  #allocation1 [shape = 'u32[144,128]{1,0:T(1,128)}', space=vmem, size = 0x12000, scoped, tag = 'internal scratch']
  %s0 = inlined_call_operand.hbm [shape: f32[16,32], index: 0, kind: input, shape index: {}]
  %s1 = inlined_call_operand.vmem [shape: f32[1,32], index: 1, kind: input, shape index: {}]
  %s2 = inlined_call_operand.hbm [shape: f32[16,32], index: 2, kind: output, shape index: {}]
  %s3 = sld [smem:[#allocation0]]
  $region22: #{tpu_custom_call.1} parent=0
    _
  %s5 = ssub.s32 1, %s3
  %s6 = scalar_select 0, %s5, %s3
  $region1: #{tpu_custom_call.1} parent=0
    #allocation2 [shape = 'u8[8192]{0}', space=vmem, size = 0x2000, scoped, tag = 'input window, operand 0, single buffered']
    #allocation3 [shape = 's32[1]{0}', space=sflag, size = 0x4, scoped, tag = 'scoped memory for tpu_custom_call.1']
    #allocation4 [shape = 's32[1]{0}', space=sflag, size = 0x4, scoped, tag = 'scoped memory for tpu_custom_call.1']
    #allocation5 [shape = 'u8[8192]{0}', space=vmem, size = 0x2000, scoped, tag = 'output window, operand 0, single buffered']
    %7 = vsyncpa [#allocation3], 0
    %8 = vsyncpa [#allocation4], 0
    // Predicated region
    $region2: #{tpu_custom_call.1} parent=1 // pred_check
      _
    $region3: #{tpu_custom_call.1} parent=1 // pred_check_branch
      %10 = sbr.rel (0) target = $region5
    $region4: #{tpu_custom_call.1} parent=1 // pred_region
      %s12 = ssub.s32 256, 256
      %13 = vsyncadd [#allocation3], %s12
      %s14 = sshll.u32 [#allocation2], 4
      %s15 = int_to_ptr.vmem [resolvable:$true] %s14
      %20 = dma.hbm_to_vmem [thread:$0]  %s0, 256, %s15, [#allocation3], 128, 128, 8
    $region5: #{tpu_custom_call.1} parent=1 // pred_fallthru
      _
    // Predicated region
    $region6: #{tpu_custom_call.1} parent=1 // pred_check
      _
    $region7: #{tpu_custom_call.1} parent=1 // pred_check_branch
      %22 = sbr.rel (0) target = $region9
    $region8: #{tpu_custom_call.1} parent=1 // pred_region
      _
    $region9: #{tpu_custom_call.1} parent=1 // pred_fallthru
      _
    // Predicated region
    $region10: #{tpu_custom_call.1} parent=1 // pred_check
      _
    $region11: #{tpu_custom_call.1} parent=1 // pred_check_branch
      %24 = sbr.rel (0) target = $region13
    $region12: #{tpu_custom_call.1} parent=1 // pred_region
      %25 = dma.done [#allocation3], 256
    $region13: #{tpu_custom_call.1} parent=1 // pred_fallthru
      _
    %v26 = vld [vmem:[#allocation2] sm:$0xff]
    %v27 = vld [vmem:[#allocation2 + $0x8] sm:$0xff]
    %v28 = vld [vmem:[%s1] sm:$0x1]
    %v29 = vmul.f32 %v26, %v26
    %v30 = vmul.f32 %v27, %v27
    %vm31 = vcmask 261120
    %v32 = vsel %vm31, %v29, 0.0
    %33 = vadd.xlane.f32.xlu0 %v32
    %v34 = vpop.xlane.xlu0 %33
    %v35 = vsel %vm31, %v30, 0.0
    %36 = vadd.xlane.f32.xlu0 %v35
    %v37 = vpop.xlane.xlu0 %36
    %v38 = vrcp.pop 32.0
    %v39 = vmul.f32 %v34, %v38
    %v40 = vmul.f32 %v37, %v38
    %v41 = vrsqrt.pop %v39
    %v42 = vrsqrt.pop %v40
    %v43 = vmul.f32 %v26, %v41
    %v44 = vmul.f32 %v27, %v42
    %v46 = vlaneseq
    %v47 = vshrl.u32 %v46, 7
    %v48 = vsub.s32 0, %v47
    %v49 = vrot.slane %v28, %v48
    %v51 = vmul.f32 %v43, %v49
    %v52 = vmul.f32 %v44, %v49
    %53 = vst.msk [vmem:[#allocation5] sm:$0xff] %vm31, %v51
    %54 = vst.msk [vmem:[#allocation5 + $0x8] sm:$0xff] %vm31, %v52
    // Predicated region
    $region14: #{tpu_custom_call.1} parent=1 // pred_check
      _
    $region15: #{tpu_custom_call.1} parent=1 // pred_check_branch
      %56 = sbr.rel (0) target = $region17
    $region16: #{tpu_custom_call.1} parent=1 // pred_region
      %s58 = ssub.s32 256, 256
      %59 = vsyncadd [#allocation4], %s58
      %s60 = sshll.u32 [#allocation5], 4
      %s61 = int_to_ptr.vmem [resolvable:$true] %s60
      %66 = dma.vmem_to_hbm [thread:$0]  %s61, 256, %s2, [#allocation4], 128, 128, 8
    $region17: #{tpu_custom_call.1} parent=1 // pred_fallthru
      _
    // Predicated region
    $region18: #{tpu_custom_call.1} parent=1 // pred_check
      _
    $region19: #{tpu_custom_call.1} parent=1 // pred_check_branch
      %68 = sbr.rel (0) target = $region21
    $region20: #{tpu_custom_call.1} parent=1 // pred_region
      %69 = dma.done [#allocation4], 256
    $region21: #{tpu_custom_call.1} parent=1 // pred_fallthru
      _
    %70 = vsyncpa [#allocation3], 1
    %71 = vsyncpa [#allocation4], 1

</llo_original>
